<compile_context>
chip_gen: v7x
topology: tpu7x:2x2x1
jax: 0.10.0
libtpu: 0.0.40
codegen_flags: <defaults>
</compile_context>

<pallas_src>
import jax
import jax.numpy as jnp
from jax.experimental import pallas as pl
from jax.experimental.pallas import tpu as pltpu


def _affine_skip_kernel(scale_ref, bias_ref, x_ref, o_ref):
    # scale/bias: f32 blocks of shape (tm, 1) or (1, tl); x/o: (tm, tl) tiles.
    # The upcast + FMA are VPU work, fully hidden in a memory-bound kernel.
    x = x_ref[...].astype(jnp.float32)
    o_ref[...] = (scale_ref[...] * x + bias_ref[...]).astype(o_ref.dtype)


def _pick_tiles(R, L, itemsize, target_bytes, row_extra, lane_extra):
    """Pick a (tm, tl) tile for an (R, L) slab.

    tm is a multiple of 8 (or == R), tl a multiple of 128 (or == L); the tile's
    VMEM footprint (x tile + padded scale/bias blocks) targets `target_bytes`.
    Partial edge blocks are fine for this elementwise kernel (OOB writes are
    dropped by Pallas).
    """
    tm_min = 8 if R >= 8 else R

    def cost(tm, tl):
        return tm * tl * itemsize + tm * row_extra + tl * lane_extra

    if cost(tm_min, L) > target_bytes and L > 128:
        # Even a minimal-row tile with full lanes blows the budget -> tile the
        # lane axis (multiples of 128 keep stores full-lane).
        tm = tm_min
        tl = (target_bytes - tm * row_extra) // (tm * itemsize + lane_extra)
        tl = min(max((tl // 128) * 128, 128), L)
    else:
        tl = L
        budget = max(target_bytes - tl * lane_extra, tl * itemsize)
        tm = budget // (tl * itemsize + row_extra)
        if tm >= R:
            tm = R
        else:
            tm = max((tm // 8) * 8, tm_min)

    # v7x megacore: keep >= 2 grid steps whenever feasible so both TensorCores
    # can stream concurrently along the 'parallel' axes.
    if pl.cdiv(R, tm) * pl.cdiv(L, tl) < 2:
        if R >= 16:
            tm = max((((R + 1) // 2) // 8) * 8, 8)
        elif L >= 256:
            tl = max((((L + 1) // 2) // 128) * 128, 128)
    return tm, tl


def _launch(x2, scale, bias, per_row):
    """Elementwise y = scale * x + bias over a 2-D lane-dense slab."""
    R, L = x2.shape
    itemsize = jnp.dtype(x2.dtype).itemsize

    # Per-chip sizing: ~VMEM/16 per tile (4 MiB on v7x, 8 MiB on v5e/v6e) and
    # an explicit scoped-VMEM limit of half the physical capacity.
    try:
        vmem_cap = int(pltpu.get_tpu_info().vmem_capacity_bytes)
    except Exception:
        vmem_cap = 64 * 1024 * 1024  # conservative (v7x-sized) fallback
    target_bytes = int(min(8 * 1024 * 1024, max(vmem_cap // 16, 2 * 1024 * 1024)))
    vmem_limit = int(vmem_cap // 2)

    # VMEM padding of the broadcast param blocks: a (tm, 1) f32 column pads its
    # lane dim to 128 (512 B per row per array); a (1, tl) f32 row pads its
    # sublane dim to 8 (32 B per lane per array). Fold that into the budget.
    row_extra = 2 * 128 * 4 if per_row else 0
    lane_extra = 0 if per_row else 2 * 8 * 4

    tm, tl = _pick_tiles(R, L, itemsize, target_bytes, row_extra, lane_extra)
    grid = (pl.cdiv(R, tm), pl.cdiv(L, tl))

    if per_row:
        # Block index ignores the inner (lane) grid axis -> the column stays
        # resident across it; no per-step re-DMA of the params.
        sb_spec = pl.BlockSpec((tm, 1), lambda i, j: (i, 0))
    else:
        # Block index ignores the row grid axis -> the row stays resident.
        sb_spec = pl.BlockSpec((1, tl), lambda i, j: (0, j))

    return pl.pallas_call(
        _affine_skip_kernel,
        out_shape=jax.ShapeDtypeStruct((R, L), x2.dtype),
        grid=grid,
        in_specs=[
            sb_spec,                                      # scale (f32)
            sb_spec,                                      # bias  (f32)
            pl.BlockSpec((tm, tl), lambda i, j: (i, j)),  # x tile (lane-dense)
        ],
        out_specs=pl.BlockSpec((tm, tl), lambda i, j: (i, j)),
        compiler_params=pltpu.CompilerParams(
            dimension_semantics=("parallel", "parallel"),
            vmem_limit_bytes=vmem_limit),
    )(scale, bias, x2)


def affine_skip_forward(x, gamma, beta, skip1, skip2):
    """x: (N, C, H, W). gamma/beta/skip1/skip2: any shape with C elements."""
    N, C, H, W = x.shape

    # Hoist the O(C) per-channel scalar math out of the kernel. Keep the fused
    # params in float32 so the in-kernel FMA is not pre-rounded to x.dtype
    # (output still keeps x.dtype, matching the all-f32 PyTorch module).
    g = gamma.reshape(-1).astype(jnp.float32)
    b = beta.reshape(-1).astype(jnp.float32)
    s1 = skip1.reshape(-1).astype(jnp.float32)
    s2 = skip2.reshape(-1).astype(jnp.float32)
    scale_c = g * (1.0 + s1)          # gamma + skip1 * gamma
    bias_c = b * (1.0 + s2)           # beta  + skip2 * beta

    L = H * W
    if L >= 128:
        # Lane-dense (N*C, H*W) slab; per-row scale/bias columns (row = n*C+c).
        R = N * C
        x2 = x.reshape(R, L)
        scale = jnp.broadcast_to(scale_c[None, :], (N, C)).reshape(R, 1)
        bias = jnp.broadcast_to(bias_c[None, :], (N, C)).reshape(R, 1)
        per_row = True
    else:
        # Small spatial dims: fold channels into the lane axis so output stores
        # stay lane-dense; per-element (1, C*H*W) scale/bias rows.
        x2 = x.reshape(N, C * L)
        scale = jnp.broadcast_to(scale_c[:, None], (C, L)).reshape(1, C * L)
        bias = jnp.broadcast_to(bias_c[:, None], (C, L)).reshape(1, C * L)
        per_row = False

    out2 = _launch(x2, scale, bias, per_row)
    return out2.reshape(N, C, H, W)


if __name__ == "__main__":
    # Small shapes consistent with the module: N=2, C=4, H=W=16.
    N, C, H, W = 2, 4, 16, 16
    key = jax.random.PRNGKey(0)
    kx, kg, kb = jax.random.split(key, 3)

    x = jax.random.normal(kx, (N, C, H, W), dtype=jnp.float32)

    # affine_gamma / affine_beta: frozen (1, C, 1, 1) params of the original
    # affine; skip1 / skip2: ones of the same shape (trainable in PyTorch).
    affine_gamma = jax.random.normal(kg, (1, C, 1, 1), dtype=jnp.float32)
    affine_beta = jax.random.normal(kb, (1, C, 1, 1), dtype=jnp.float32)
    skip1 = jnp.ones((1, C, 1, 1), dtype=jnp.float32)
    skip2 = jnp.ones((1, C, 1, 1), dtype=jnp.float32)

    y = affine_skip_forward(x, affine_gamma, affine_beta, skip1, skip2)
    y = jax.block_until_ready(y)

    # Pure-JAX reference check (silent).
    gamma_v = affine_gamma.reshape(1, C, 1, 1)
    beta_v = affine_beta.reshape(1, C, 1, 1)
    y_ref = (gamma_v + skip1 * gamma_v) * x + (beta_v + skip2 * beta_v)
    assert jnp.allclose(y, y_ref, atol=1e-5, rtol=1e-5)

    print("KERNEL_OK")
</pallas_src>

<mosaic_0001>
module attributes {stable_mosaic.version = 11 : i64} {
  func.func @_affine_skip_kernel(%arg0: i32, %arg1: i32, %arg2: memref<8x1xf32, #tpu.memory_space<vmem>>, %arg3: memref<8x1xf32, #tpu.memory_space<vmem>>, %arg4: memref<8x128xf32, #tpu.memory_space<vmem>>, %arg5: memref<8x128xf32, #tpu.memory_space<vmem>>) attributes {dimension_semantics = [#tpu.dimension_semantics<parallel>, #tpu.dimension_semantics<parallel>], iteration_bounds = array<i64: 1, 2>, scalar_prefetch = 0 : i64, scratch_operands = 0 : i64, tpu.core_type = #tpu.core_type<tc>, window_params = [{transform_indices = @transform_0, window_bounds = array<i64: 8, 1>}, {transform_indices = @transform_1, window_bounds = array<i64: 8, 1>}, {transform_indices = @transform_2, window_bounds = array<i64: 8, 128>}, {transform_indices = @transform_3, window_bounds = array<i64: 8, 128>}]} {
    %c0 = arith.constant 0 : index
    %c0_0 = arith.constant 0 : index
    %0 = vector.load %arg4[%c0, %c0_0] : memref<8x128xf32, #tpu.memory_space<vmem>>, vector<8x128xf32>
    %c0_1 = arith.constant 0 : index
    %c0_2 = arith.constant 0 : index
    %1 = vector.load %arg2[%c0_1, %c0_2] : memref<8x1xf32, #tpu.memory_space<vmem>>, vector<8x1xf32>
    %2 = vector.broadcast %1 : vector<8x1xf32> to vector<8x128xf32>
    %3 = arith.mulf %2, %0 : vector<8x128xf32>
    %c0_3 = arith.constant 0 : index
    %c0_4 = arith.constant 0 : index
    %4 = vector.load %arg3[%c0_3, %c0_4] : memref<8x1xf32, #tpu.memory_space<vmem>>, vector<8x1xf32>
    %5 = vector.broadcast %4 : vector<8x1xf32> to vector<8x128xf32>
    %6 = arith.addf %3, %5 : vector<8x128xf32>
    %c0_5 = arith.constant 0 : index
    %c0_6 = arith.constant 0 : index
    %7 = vector.load %arg5[%c0_5, %c0_6] : memref<8x128xf32, #tpu.memory_space<vmem>>, vector<8x128xf32>
    tpu.vector_store %arg5[%c0_5, %c0_6], %6 {strides = array<i32>} : memref<8x128xf32, #tpu.memory_space<vmem>>, vector<8x128xf32>,
    return
  }
  func.func @transform_0(%arg0: i32, %arg1: i32) -> (i32, i32) {
    %c0_i32 = arith.constant 0 : i32
    %c0_i32_0 = arith.constant 0 : i32
    return %arg0, %c0_i32 : i32, i32
  }
  func.func @transform_1(%arg0: i32, %arg1: i32) -> (i32, i32) {
    %c0_i32 = arith.constant 0 : i32
    %c0_i32_0 = arith.constant 0 : i32
    return %arg0, %c0_i32 : i32, i32
  }
  func.func @transform_2(%arg0: i32, %arg1: i32) -> (i32, i32) {
    %c0_i32 = arith.constant 0 : i32
    return %arg0, %arg1 : i32, i32
  }
  func.func @transform_3(%arg0: i32, %arg1: i32) -> (i32, i32) {
    %c0_i32 = arith.constant 0 : i32
    return %arg0, %arg1 : i32, i32
  }
}

</mosaic_0001>

<llo_original>
// kernel: tpu_custom_call.1
$region0: #{tpu_custom_call.1}
  #allocation0 [shape = 'u32[]', space=smem, size = 0x4, offset = 0x4, fixed_abs, tag = 'smem constant byte address 0x4 - core index']
  #allocation1 [shape = 'u32[144,128]{1,0:T(1,128)}', space=vmem, size = 0x12000, scoped, tag = 'internal scratch']
  %s0 = inlined_call_operand.vmem [shape: f32[8,1], index: 0, kind: input, shape index: {}]
  %s1 = inlined_call_operand.vmem [shape: f32[8,1], index: 1, kind: input, shape index: {}]
  %s2 = inlined_call_operand.vmem [shape: f32[8,256], index: 2, kind: input, shape index: {}]
  %s3 = inlined_call_operand.hbm [shape: f32[8,256], index: 3, kind: output, shape index: {}]
  %s4 = sld [smem:[#allocation0]]
  $region45: #{tpu_custom_call.1} parent=0
    _
  %s6 = ssub.s32 1, %s4
  %s7 = scalar_select 0, %s6, %s4
  $region1: #{tpu_custom_call.1} parent=0
    #allocation2 [shape = 'u8[8192]{0}', space=vmem, size = 0x2000, scoped, tag = 'output window, operand 0']
    #allocation3 [shape = 's32[2]{0}', space=sflag, size = 0x8, scoped, tag = 'scoped memory for tpu_custom_call.1']
    %8 = vsyncpa [#allocation3], 0
    %s9 = scalar_lea.sflag [#allocation3], 1
    %10 = vsyncpa %s9, 0
    loop: start=0, step=1, limit=4
    $region2: #{tpu_custom_call.1} parent=1 // loop_pre_header
      _
    $region3: #{tpu_custom_call.1} parent=1 // loop_header
      %s12 = sphi 0, %s16
      %p13 = scmp.ge.s32.totalorder %s12, 4
      %s19 = sphi 0, %s31
      %s20 = sphi 0, %s27
      %s21 = sphi 0, %s19
      %s22 = sphi 0, %s20
      %s23 = sphi 0, %s21
      %s24 = sphi 0, %s22
      %s34 = sphi 0, %s36
      %s37 = sphi 0, %s34
      %s38 = sphi 0, %s37
      %s54 = sphi 0, %s38
      %s60 = sphi 0, %s62
      %s63 = sphi 0, %s60
      %s64 = sphi 0, %s63
      %s80 = sphi 0, %s64
      %s88 = sphi 0, %s90
      %s91 = sphi 0, %s88
      %s92 = sphi 0, %s91
      %s108 = sphi 0, %s92
      %s116 = sphi 0, %s118
      %s119 = sphi 0, %s116
      %s120 = sphi 0, %s119
      %s136 = sphi 0, %s120
    $region4: #{tpu_custom_call.1} parent=1 // loop_header_branch
      %15 = sbr.rel (%p13) target = $region8
    $region5: #{tpu_custom_call.1} parent=1 // loop_body
      %s17 = ssub.s32 %s12, 1
      %s18 = ssub.s32 %s12, 2
      %s25 = sadd.s32 1, %s20
      %p26 = scmp.ge.s32.totalorder %s25, 2
      %s27 = scalar_select %p26, 0, %s25
      %s28 = sadd.s32 1, %s19
      %s29 = scalar_select %p26, %s28, %s19
      %p30 = scmp.ge.s32.totalorder %s29, 1
      %s31 = scalar_select %p30, 0, %s29
      %s32 = ssub.s32 %s19, %s31
      %p33 = scmp.eq.s32.totalorder %s32, 0
      %s35 = sadd.s32 %s34, 1
      %s36 = scalar_select %p33, %s34, %s35
      %p39 = pneg %p33
      %p40 = scmp.eq.s32.totalorder %s12, 1
      %p41 = por %p39, %p40
      %p42 = scmp.ne.s32.totalorder %s34, %s37
      %p43 = scmp.eq.s32.totalorder %s12, 0
      %p44 = por %p42, %p43
      %p45 = scmp.ne.s32.totalorder %s34, %s37
      %p46 = scmp.eq.s32.totalorder %s17, 1
      %p47 = por %p45, %p46
      %p48 = scmp.ne.s32.totalorder %s37, %s38
      %p49 = scmp.eq.s32.totalorder %s17, 0
      %p50 = por %p48, %p49
      %p51 = scmp.ne.s32.totalorder %s37, %s38
      %p52 = scmp.eq.s32.totalorder %s18, 1
      %p53 = por %p51, %p52
      %p55 = scmp.ne.s32.totalorder %s38, %s54
      %p56 = scmp.eq.s32.totalorder %s18, 0
      %p57 = por %p55, %p56
      %s58 = ssub.s32 %s19, %s31
      %p59 = scmp.eq.s32.totalorder %s58, 0
      %s61 = sadd.s32 %s60, 1
      %s62 = scalar_select %p59, %s60, %s61
      %p65 = pneg %p59
      %p66 = scmp.eq.s32.totalorder %s12, 1
      %p67 = por %p65, %p66
      %p68 = scmp.ne.s32.totalorder %s60, %s63
      %p69 = scmp.eq.s32.totalorder %s12, 0
      %p70 = por %p68, %p69
      %p71 = scmp.ne.s32.totalorder %s60, %s63
      %p72 = scmp.eq.s32.totalorder %s17, 1
      %p73 = por %p71, %p72
      %p74 = scmp.ne.s32.totalorder %s63, %s64
      %p75 = scmp.eq.s32.totalorder %s17, 0
      %p76 = por %p74, %p75
      %p77 = scmp.ne.s32.totalorder %s63, %s64
      %p78 = scmp.eq.s32.totalorder %s18, 1
      %p79 = por %p77, %p78
      %p81 = scmp.ne.s32.totalorder %s64, %s80
      %p82 = scmp.eq.s32.totalorder %s18, 0
      %p83 = por %p81, %p82
      %s84 = ssub.s32 %s19, %s31
      %s85 = ssub.s32 %s20, %s27
      %s86 = sor.u32 %s84, %s85
      %p87 = scmp.eq.s32.totalorder %s86, 0
      %s89 = sadd.s32 %s88, 1
      %s90 = scalar_select %p87, %s88, %s89
      %p93 = pneg %p87
      %p94 = scmp.eq.s32.totalorder %s12, 1
      %p95 = por %p93, %p94
      %p96 = scmp.ne.s32.totalorder %s88, %s91
      %p97 = scmp.eq.s32.totalorder %s12, 0
      %p98 = por %p96, %p97
      %p99 = scmp.ne.s32.totalorder %s88, %s91
      %p100 = scmp.eq.s32.totalorder %s17, 1
      %p101 = por %p99, %p100
      %p102 = scmp.ne.s32.totalorder %s91, %s92
      %p103 = scmp.eq.s32.totalorder %s17, 0
      %p104 = por %p102, %p103
      %p105 = scmp.ne.s32.totalorder %s91, %s92
      %p106 = scmp.eq.s32.totalorder %s18, 1
      %p107 = por %p105, %p106
      %p109 = scmp.ne.s32.totalorder %s92, %s108
      %p110 = scmp.eq.s32.totalorder %s18, 0
      %p111 = por %p109, %p110
      %s112 = ssub.s32 %s19, %s31
      %s113 = ssub.s32 %s20, %s27
      %s114 = sor.u32 %s112, %s113
      %p115 = scmp.eq.s32.totalorder %s114, 0
      %s117 = sadd.s32 %s116, 1
      %s118 = scalar_select %p115, %s116, %s117
      %p121 = pneg %p115
      %p122 = scmp.eq.s32.totalorder %s12, 1
      %p123 = por %p121, %p122
      %p124 = scmp.ne.s32.totalorder %s116, %s119
      %p125 = scmp.eq.s32.totalorder %s12, 0
      %p126 = por %p124, %p125
      %p127 = scmp.ne.s32.totalorder %s116, %s119
      %p128 = scmp.eq.s32.totalorder %s17, 1
      %p129 = por %p127, %p128
      %p130 = scmp.ne.s32.totalorder %s119, %s120
      %p131 = scmp.eq.s32.totalorder %s17, 0
      %p132 = por %p130, %p131
      %p133 = scmp.ne.s32.totalorder %s119, %s120
      %p134 = scmp.eq.s32.totalorder %s18, 1
      %p135 = por %p133, %p134
      %p137 = scmp.ne.s32.totalorder %s120, %s136
      %p138 = scmp.eq.s32.totalorder %s18, 0
      %p139 = por %p137, %p138
      %p140 = scmp.le.s32.totalorder 1, %s12
      %p141 = scmp.lt.s32.totalorder %s12, 3
      %p142 = pnand %p140, %p141
      %p143 = pneg %p142
      // Predicated region
      $region9: #{tpu_custom_call.1} parent=5 // pred_check
        _
      $region10: #{tpu_custom_call.1} parent=5 // pred_check_branch
        %145 = sbr.rel (%p142) target = $region12
      $region11: #{tpu_custom_call.1} parent=5 // pred_region
        %s146 = ssub.s32 %s12, 1
        // Predicated region
        $region13: #{tpu_custom_call.1} parent=11 // pred_check
          %p147 = pneg %p50
        $region14: #{tpu_custom_call.1} parent=11 // pred_check_branch
          %149 = sbr.rel (%p147) target = $region16
        $region15: #{tpu_custom_call.1} parent=11 // pred_region
          %p150 = scmp.lt.s32.totalorder %s21, 0
          %s151 = scalar_select %p150, %s21, 0
          %s152 = smul.addr %s151, 8
          %s153 = scalar_lea.vmem %s0, %s152
        $region16: #{tpu_custom_call.1} parent=11 // pred_fallthru
          _
        // Predicated region
        $region17: #{tpu_custom_call.1} parent=11 // pred_check
          %p154 = pneg %p76
        $region18: #{tpu_custom_call.1} parent=11 // pred_check_branch
          %156 = sbr.rel (%p154) target = $region20
        $region19: #{tpu_custom_call.1} parent=11 // pred_region
          %p157 = scmp.lt.s32.totalorder %s21, 0
          %s158 = scalar_select %p157, %s21, 0
          %s159 = smul.addr %s158, 8
          %s160 = scalar_lea.vmem %s1, %s159
        $region20: #{tpu_custom_call.1} parent=11 // pred_fallthru
          _
      $region12: #{tpu_custom_call.1} parent=5 // pred_fallthru
        _
      %p161 = scmp.lt.s32.totalorder %s12, 2
      // Predicated region
      $region21: #{tpu_custom_call.1} parent=5 // pred_check
        %p162 = pneg %p161
      $region22: #{tpu_custom_call.1} parent=5 // pred_check_branch
        %164 = sbr.rel (%p162) target = $region24
      $region23: #{tpu_custom_call.1} parent=5 // pred_region
        // Predicated region
        $region25: #{tpu_custom_call.1} parent=23 // pred_check
          %p165 = pneg %p98
        $region26: #{tpu_custom_call.1} parent=23 // pred_check_branch
          %167 = sbr.rel (%p165) target = $region28
        $region27: #{tpu_custom_call.1} parent=23 // pred_region
          %p168 = scmp.lt.s32.totalorder %s19, 0
          %s169 = scalar_select %p168, %s19, 0
          %p170 = scmp.lt.s32.totalorder %s20, 1
          %s171 = scalar_select %p170, %s20, 1
          %s172 = smul.addr %s169, 2
          %s173 = sadd.s32 %s171, %s172
          %s174 = smul.addr %s173, 8
          %s175 = scalar_lea.vmem %s2, %s174
        $region28: #{tpu_custom_call.1} parent=23 // pred_fallthru
          _
      $region24: #{tpu_custom_call.1} parent=5 // pred_fallthru
        _
      %p176 = scmp.le.s32.totalorder 1, %s12
      %p177 = scmp.lt.s32.totalorder %s12, 3
      %p178 = pnand %p176, %p177
      %p179 = pneg %p178
      // Predicated region
      $region29: #{tpu_custom_call.1} parent=5 // pred_check
        _
      $region30: #{tpu_custom_call.1} parent=5 // pred_check_branch
        %181 = sbr.rel (%p178) target = $region32
      $region31: #{tpu_custom_call.1} parent=5 // pred_region
        %s182 = ssub.s32 %s12, 1
        %p183 = scmp.lt.s32.totalorder %s21, 0
        %s184 = scalar_select %p183, %s21, 0
        %s185 = smul.addr %s184, 8
        %s186 = scalar_lea.vmem %s0, %s185
        %p187 = pneg %p50
        %p188 = pneg %p47
        %p189 = scmp.lt.s32.totalorder %s21, 0
        %s190 = scalar_select %p189, %s21, 0
        %s191 = smul.addr %s190, 8
        %s192 = scalar_lea.vmem %s1, %s191
        %p193 = pneg %p76
        %p194 = pneg %p73
        %p195 = scmp.lt.s32.totalorder %s21, 0
        %s196 = scalar_select %p195, %s21, 0
        %p197 = scmp.lt.s32.totalorder %s22, 1
        %s198 = scalar_select %p197, %s22, 1
        %s199 = smul.addr %s196, 2
        %s200 = sadd.s32 %s198, %s199
        %s201 = smul.addr %s200, 8
        %s202 = scalar_lea.vmem %s2, %s201
        %p203 = pneg %p104
        %p204 = pneg %p101
        %p205 = pneg %p132
        %p206 = pneg %p129
        %s207 = sand.u32 %s119, 1
        %s208 = scalar_lea.sflag [#allocation3], %s207
        %s209 = sand.u32 %s119, 1
        %s210 = smul.addr %s209, 8
        %s211 = scalar_lea.vmem [#allocation2], %s210
        %p212 = scmp.lt.s32.totalorder %s21, 0
        %s213 = scalar_select %p212, %s21, 0
        %s214 = smul.addr %s213, 8
        %s215 = scalar_lea.vmem %s0, %s214
        %p216 = scmp.lt.s32.totalorder %s21, 0
        %s217 = scalar_select %p216, %s21, 0
        %s218 = smul.addr %s217, 8
        %s219 = scalar_lea.vmem %s1, %s218
        %p220 = scmp.lt.s32.totalorder %s21, 0
        %s221 = scalar_select %p220, %s21, 0
        %p222 = scmp.lt.s32.totalorder %s22, 1
        %s223 = scalar_select %p222, %s22, 1
        %s224 = smul.addr %s221, 2
        %s225 = sadd.s32 %s223, %s224
        %s226 = smul.addr %s225, 8
        %s227 = scalar_lea.vmem %s2, %s226
        %v228 = vld [vmem:[%s227] sm:$0xff]
        %v229 = vld [vmem:[%s215] sm:$0xff]
        %231 = vset.pattern.permute.xlu0 0
        %232 = vperm.xlu0 %231, %v229
        %v233 = vpop.permute.xlu0 %232
        %v235 = vmul.f32 %v233, %v228
        %v236 = vld [vmem:[%s219] sm:$0xff]
        %238 = vset.pattern.permute.xlu0 0
        %239 = vperm.xlu0 %238, %v236
        %v240 = vpop.permute.xlu0 %239
        %v242 = vadd.f32 %v235, %v240
        %243 = vst [vmem:[%s211] sm:$0xff] %v242
        %s244 = sand.u32 %s119, 1
        %s245 = scalar_lea.sflag [#allocation3], %s244
        %s246 = sand.u32 %s119, 1
        %s247 = smul.addr %s246, 8
        %s248 = scalar_lea.vmem [#allocation2], %s247
        // Predicated region
        $region33: #{tpu_custom_call.1} parent=31 // pred_check
          %p249 = pneg %p129
        $region34: #{tpu_custom_call.1} parent=31 // pred_check_branch
          %251 = sbr.rel (%p249) target = $region36
        $region35: #{tpu_custom_call.1} parent=31 // pred_region
          %s253 = ssub.s32 128, 128
          %254 = vsyncadd %s245, %s253
          %s255 = smul.addr %s21, 2
          %s256 = sadd.s32 %s22, %s255
          %s257 = smul.addr %s256, 128
          %s258 = scalar_lea.hbm %s3, %s257
          %s260 = sshll.u32 %s248, 4
          %s261 = int_to_ptr.vmem [resolvable:$true] %s260
          %263 = dma.vmem_to_hbm [thread:$0]  %s261, 128, %s258, %s245
        $region36: #{tpu_custom_call.1} parent=31 // pred_fallthru
          _
      $region32: #{tpu_custom_call.1} parent=5 // pred_fallthru
        _
      %p264 = scmp.le.s32.totalorder 2, %s12
      // Predicated region
      $region37: #{tpu_custom_call.1} parent=5 // pred_check
        %p265 = pneg %p264
      $region38: #{tpu_custom_call.1} parent=5 // pred_check_branch
        %267 = sbr.rel (%p265) target = $region40
      $region39: #{tpu_custom_call.1} parent=5 // pred_region
        %s268 = ssub.s32 %s12, 2
        // Predicated region
        $region41: #{tpu_custom_call.1} parent=39 // pred_check
          %p269 = pneg %p135
        $region42: #{tpu_custom_call.1} parent=39 // pred_check_branch
          %271 = sbr.rel (%p269) target = $region44
        $region43: #{tpu_custom_call.1} parent=39 // pred_region
          %s272 = sand.u32 %s120, 1
          %s273 = scalar_lea.sflag [#allocation3], %s272
          %s274 = sand.u32 %s120, 1
          %s275 = smul.addr %s274, 8
          %s276 = scalar_lea.vmem [#allocation2], %s275
          %277 = dma.done %s273, 128
        $region44: #{tpu_custom_call.1} parent=39 // pred_fallthru
          _
      $region40: #{tpu_custom_call.1} parent=5 // pred_fallthru
        _
    $region6: #{tpu_custom_call.1} parent=1 // loop_footer
      %s16 = sadd.s32 1, %s12
    $region7: #{tpu_custom_call.1} parent=1 // loop_footer_branch
      %11 = sbr.rel target = $region3
    $region8: #{tpu_custom_call.1} parent=1 // loop_exit
      _
    %278 = vsyncpa [#allocation3], 1
    %s279 = scalar_lea.sflag [#allocation3], 1
    %280 = vsyncpa %s279, 1

</llo_original>
